<compile_context>
chip_gen: v6e
topology: v6e:2x2x1
jax: 0.10.0
libtpu: 0.0.40
codegen_flags: <defaults>
</compile_context>

<pallas_src>
import math

import jax
import jax.numpy as jnp
from jax.experimental import pallas as pl
from jax.experimental.pallas import tpu as pltpu


# ----------------------------- Pallas kernel -------------------------------

def _conv1x1_bn_kernel(x_ref, w_ref, b_ref, o_ref):
    # x_ref: (BN, Cin, T) input dtype   w_ref: (Cout, Cin) bf16
    # b_ref: (Cout, 1) f32 (folded BN)  o_ref: (BN, Cout, T)
    w = w_ref[...]
    b = b_ref[...]
    # Static, short loop over the images in this block (BN <= 8).
    for i in range(x_ref.shape[0]):
        acc = jnp.dot(w, x_ref[i].astype(jnp.bfloat16),
                      preferred_element_type=jnp.float32)
        o_ref[i] = (acc + b).astype(o_ref.dtype)


# ----------------------------- Pallas wrapper -------------------------------

def _cdiv(a, b):
    return -(-a // b)


def _pick_hw_tile(hw, max_tile=512):
    """Spatial tile: full extent if small, else a multiple-of-128 divisor."""
    if hw <= max_tile:
        return hw
    for t in range(max_tile, 0, -128):
        if hw % t == 0:
            return t
    return hw  # no clean divisor: keep full extent (single spatial tile)


def conv1x1_bn_nchw(x, w_oc_ic, bias, *, out_dtype=None):
    """y[n, o, p] = sum_c w[o, c] * x[n, c, p] + bias[o]  (NCHW-native)."""
    n, cin, hw = x.shape
    cout, cin_w = w_oc_ic.shape
    assert cin == cin_w, (cin, cin_w)
    out_dtype = x.dtype if out_dtype is None else out_dtype

    bn = min(n, 8)                       # images per block (static in-kernel loop)
    t = _pick_hw_tile(hw)                # spatial tile (lane dim)
    grid = (_cdiv(n, bn), _cdiv(hw, t))

    # Tiny grids: keep sequential ("arbitrary") so v7x megacore does not split
    # a minuscule matmul across cores; large grids get parallel sharding.
    if grid[0] * grid[1] >= 4:
        dim_sem = ("parallel", "parallel")
    else:
        dim_sem = ("arbitrary", "arbitrary")

    wb = w_oc_ic.astype(jnp.bfloat16)
    bb = bias.reshape(cout, 1).astype(jnp.float32)

    return pl.pallas_call(
        _conv1x1_bn_kernel,
        out_shape=jax.ShapeDtypeStruct((n, cout, hw), out_dtype),
        grid=grid,
        in_specs=[
            pl.BlockSpec((bn, cin, t), lambda b, s: (b, 0, s)),   # activations
            pl.BlockSpec((cout, cin), lambda b, s: (0, 0)),       # folded weights (resident)
            pl.BlockSpec((cout, 1), lambda b, s: (0, 0)),         # folded-BN bias (resident)
        ],
        out_specs=pl.BlockSpec((bn, cout, t), lambda b, s: (b, 0, s)),
        compiler_params=pltpu.CompilerParams(dimension_semantics=dim_sem),
    )(x, wb, bb)


# ------------------------------- parameters ---------------------------------

def init_adjust_layer_params(key, in_channels, out_channels, eps=1e-5):
    # 1x1 conv weight stored as (Cout, Cin) (PyTorch (Cout, Cin, 1, 1) squeezed).
    std = 1.0 / math.sqrt(in_channels)
    w = std * jax.random.normal(key, (out_channels, in_channels), dtype=jnp.float32)
    return dict(
        w=w,
        gamma=jnp.ones((out_channels,), jnp.float32),
        beta=jnp.zeros((out_channels,), jnp.float32),
        mean=jnp.zeros((out_channels,), jnp.float32),
        var=jnp.ones((out_channels,), jnp.float32),
        eps=jnp.float32(eps),
    )


# --------------------------------- forward ----------------------------------

def adjust_layer_forward(params, x_nchw):
    # TODO(synk): BatchNorm is applied in inference form with the module's
    # freshly-initialized running stats (gamma=1, beta=0, mean=0, var=1);
    # training-mode batch statistics / running-stat updates are not modeled.
    n, cin, h, wd = x_nchw.shape

    scale = params['gamma'] / jnp.sqrt(params['var'] + params['eps'])
    bias = params['beta'] - params['mean'] * scale
    w_folded = params['w'] * scale[:, None]          # fold BN scale into (Cout, Cin)
    cout = w_folded.shape[0]

    # Crop BEFORE the conv.  A 1x1 conv + per-channel affine commutes with a
    # spatial crop, so this is exactly equivalent to cropping the output
    # (ONLY because kernel_size == 1 -- do not reuse for a spatial kernel).
    if wd < 20:                                      # static shape check
        x_nchw = x_nchw[:, :, 4:11, 4:11]            # x[:, :, l:r, l:r], l=4, r=11
        h, wd = x_nchw.shape[2], x_nchw.shape[3]

    x_flat = x_nchw.reshape(n, cin, h * wd)          # free reshape (contiguous NCHW)
    y = conv1x1_bn_nchw(x_flat, w_folded, bias)      # stays NCHW throughout
    return y.reshape(n, cout, h, wd)                 # free reshape


# ----------------------------------- main ------------------------------------

if __name__ == "__main__":
    key = jax.random.PRNGKey(0)
    pkey, xkey, xkey2 = jax.random.split(key, 3)

    in_channels, out_channels = 128, 256
    params = init_adjust_layer_params(pkey, in_channels, out_channels)

    fwd = jax.jit(adjust_layer_forward)

    # Reference pieces (plain JAX, f32).
    scale = params['gamma'] / jnp.sqrt(params['var'] + params['eps'])
    bias = params['beta'] - params['mean'] * scale

    # ---- Path 1: spatial 16 (< 20) -> crop branch fires -> (2, 256, 7, 7) ----
    x = jax.random.normal(xkey, (2, in_channels, 16, 16), dtype=jnp.float32)
    out = fwd(params, x)
    jax.block_until_ready(out)
    assert out.shape == (2, out_channels, 7, 7), out.shape
    assert out.dtype == jnp.float32, out.dtype
    assert bool(jnp.all(jnp.isfinite(out)))

    ref = (jnp.einsum('oc,nchw->nohw', params['w'], x)
           * scale[None, :, None, None] + bias[None, :, None, None])
    ref = ref[:, :, 4:11, 4:11]
    assert jnp.allclose(out, ref, atol=5e-2, rtol=5e-2), \
        float(jnp.max(jnp.abs(out - ref)))

    # ---- Path 2: spatial 24 (>= 20) -> no crop -> (2, 256, 24, 24) ----
    x2 = jax.random.normal(xkey2, (2, in_channels, 24, 24), dtype=jnp.float32)
    out2 = fwd(params, x2)
    jax.block_until_ready(out2)
    assert out2.shape == (2, out_channels, 24, 24), out2.shape

    ref2 = (jnp.einsum('oc,nchw->nohw', params['w'], x2)
            * scale[None, :, None, None] + bias[None, :, None, None])
    assert jnp.allclose(out2, ref2, atol=5e-2, rtol=5e-2), \
        float(jnp.max(jnp.abs(out2 - ref2)))

    print("KERNEL_OK")
</pallas_src>

<mosaic_0001>
module attributes {stable_mosaic.version = 11 : i64} {
  func.func @_conv1x1_bn_kernel(%arg0: i32, %arg1: i32, %arg2: memref<2x128x49xf32, #tpu.memory_space<vmem>>, %arg3: memref<256x128xbf16, #tpu.memory_space<vmem>>, %arg4: memref<256x1xf32, #tpu.memory_space<vmem>>, %arg5: memref<2x256x49xf32, #tpu.memory_space<vmem>>) attributes {dimension_semantics = [#tpu.dimension_semantics<arbitrary>, #tpu.dimension_semantics<arbitrary>], iteration_bounds = array<i64: 1, 1>, scalar_prefetch = 0 : i64, scratch_operands = 0 : i64, tpu.core_type = #tpu.core_type<tc>, window_params = [{transform_indices = @transform_0, window_bounds = array<i64: 2, 128, 49>}, {pipeline_mode = #tpu.pipeline_mode<synchronous>, transform_indices = @transform_1, window_bounds = array<i64: 256, 128>}, {pipeline_mode = #tpu.pipeline_mode<synchronous>, transform_indices = @transform_2, window_bounds = array<i64: 256, 1>}, {transform_indices = @transform_3, window_bounds = array<i64: 2, 256, 49>}]} {
    %c0 = arith.constant 0 : index
    %c0_0 = arith.constant 0 : index
    %0 = vector.load %arg3[%c0, %c0_0] : memref<256x128xbf16, #tpu.memory_space<vmem>>, vector<256x128xbf16>
    %c0_1 = arith.constant 0 : index
    %c0_2 = arith.constant 0 : index
    %1 = vector.load %arg4[%c0_1, %c0_2] : memref<256x1xf32, #tpu.memory_space<vmem>>, vector<256x1xf32>
    %c0_3 = arith.constant 0 : index
    %c0_4 = arith.constant 0 : index
    %c0_5 = arith.constant 0 : index
    %2 = vector.load %arg2[%c0_3, %c0_4, %c0_5] : memref<2x128x49xf32, #tpu.memory_space<vmem>>, vector<1x128x49xf32>
    %3 = vector.shape_cast %2 : vector<1x128x49xf32> to vector<128x49xf32>
    %4 = arith.truncf %3 : vector<128x49xf32> to vector<128x49xbf16>
    %cst = arith.constant dense<0.000000e+00> : vector<256x49xf32>
    %5 = tpu.matmul %0, %4, %cst {dimension_numbers = #tpu.dot_dimension_numbers<[1], [0], [0], [1], [0, 0, 1, 1], [], []>} : vector<256x128xbf16>, vector<128x49xbf16>, vector<256x49xf32> -> vector<256x49xf32>
    %6 = vector.broadcast %1 : vector<256x1xf32> to vector<256x49xf32>
    %7 = arith.addf %5, %6 : vector<256x49xf32>
    %c0_6 = arith.constant 0 : index
    %c0_7 = arith.constant 0 : index
    %c0_8 = arith.constant 0 : index
    %8 = vector.load %arg5[%c0_6, %c0_7, %c0_8] : memref<2x256x49xf32, #tpu.memory_space<vmem>>, vector<1x256x49xf32>
    %9 = vector.shape_cast %8 : vector<1x256x49xf32> to vector<256x49xf32>
    %10 = vector.shape_cast %7 : vector<256x49xf32> to vector<1x256x49xf32>
    tpu.vector_store %arg5[%c0_6, %c0_7, %c0_8], %10 {strides = array<i32>} : memref<2x256x49xf32, #tpu.memory_space<vmem>>, vector<1x256x49xf32>,
    %c1 = arith.constant 1 : index
    %c0_9 = arith.constant 0 : index
    %c0_10 = arith.constant 0 : index
    %11 = vector.load %arg2[%c1, %c0_9, %c0_10] : memref<2x128x49xf32, #tpu.memory_space<vmem>>, vector<1x128x49xf32>
    %12 = vector.shape_cast %11 : vector<1x128x49xf32> to vector<128x49xf32>
    %13 = arith.truncf %12 : vector<128x49xf32> to vector<128x49xbf16>
    %cst_11 = arith.constant dense<0.000000e+00> : vector<256x49xf32>
    %14 = tpu.matmul %0, %13, %cst_11 {dimension_numbers = #tpu.dot_dimension_numbers<[1], [0], [0], [1], [0, 0, 1, 1], [], []>} : vector<256x128xbf16>, vector<128x49xbf16>, vector<256x49xf32> -> vector<256x49xf32>
    %15 = vector.broadcast %1 : vector<256x1xf32> to vector<256x49xf32>
    %16 = arith.addf %14, %15 : vector<256x49xf32>
    %c1_12 = arith.constant 1 : index
    %c0_13 = arith.constant 0 : index
    %c0_14 = arith.constant 0 : index
    %17 = vector.load %arg5[%c1_12, %c0_13, %c0_14] : memref<2x256x49xf32, #tpu.memory_space<vmem>>, vector<1x256x49xf32>
    %18 = vector.shape_cast %17 : vector<1x256x49xf32> to vector<256x49xf32>
    %19 = vector.shape_cast %16 : vector<256x49xf32> to vector<1x256x49xf32>
    tpu.vector_store %arg5[%c1_12, %c0_13, %c0_14], %19 {strides = array<i32>} : memref<2x256x49xf32, #tpu.memory_space<vmem>>, vector<1x256x49xf32>,
    return
  }
  func.func @transform_0(%arg0: i32, %arg1: i32) -> (i32, i32, i32) {
    %c0_i32 = arith.constant 0 : i32
    %c0_i32_0 = arith.constant 0 : i32
    return %arg0, %c0_i32, %arg1 : i32, i32, i32
  }
  func.func @transform_1(%arg0: i32, %arg1: i32) -> (i32, i32) {
    %c0_i32 = arith.constant 0 : i32
    %c0_i32_0 = arith.constant 0 : i32
    %c0_i32_1 = arith.constant 0 : i32
    return %c0_i32, %c0_i32_0 : i32, i32
  }
  func.func @transform_2(%arg0: i32, %arg1: i32) -> (i32, i32) {
    %c0_i32 = arith.constant 0 : i32
    %c0_i32_0 = arith.constant 0 : i32
    %c0_i32_1 = arith.constant 0 : i32
    return %c0_i32, %c0_i32_0 : i32, i32
  }
  func.func @transform_3(%arg0: i32, %arg1: i32) -> (i32, i32, i32) {
    %c0_i32 = arith.constant 0 : i32
    %c0_i32_0 = arith.constant 0 : i32
    return %arg0, %c0_i32, %arg1 : i32, i32, i32
  }
}

</mosaic_0001>

<llo_original>
// kernel: adjust_layer_forward.1
$region0: #{adjust_layer_forward.1}
  #allocation0 [shape = 'u32[]', space=smem, size = 0x4, offset = 0x4, fixed_abs, tag = 'smem constant byte address 0x4 - core index']
  #allocation1 [shape = 'u32[144,128]{1,0:T(1,128)}', space=vmem, size = 0x12000, scoped, tag = 'internal scratch']
  %s0 = inlined_call_operand.vmem [shape: f32[2,128,49], index: 0, kind: input, shape index: {}]
  %s1 = inlined_call_operand.vmem [shape: bf16[256,128], index: 1, kind: input, shape index: {}]
  %s2 = inlined_call_operand.vmem [shape: f32[256,1], index: 2, kind: input, shape index: {}]
  %s3 = inlined_call_operand.vmem [shape: f32[2,256,49], index: 3, kind: output, shape index: {}]
  %s4 = sld [smem:[#allocation0]]
  $region22: #{adjust_layer_forward.1} parent=0
    _
  %s6 = ssub.s32 1, %s4
  %s7 = scalar_select 0, %s6, %s4
  // Predicated region
  $region2: #{adjust_layer_forward.1} parent=0 // pred_check
    _
  $region3: #{adjust_layer_forward.1} parent=0 // pred_check_branch
    %9 = sbr.rel (0) target = $region5
  $region4: #{adjust_layer_forward.1} parent=0 // pred_region
    _
  $region5: #{adjust_layer_forward.1} parent=0 // pred_fallthru
    _
  // Predicated region
  $region6: #{adjust_layer_forward.1} parent=0 // pred_check
    _
  $region7: #{adjust_layer_forward.1} parent=0 // pred_check_branch
    %11 = sbr.rel (0) target = $region9
  $region8: #{adjust_layer_forward.1} parent=0 // pred_region
    _
  $region9: #{adjust_layer_forward.1} parent=0 // pred_fallthru
    _
  // Predicated region
  $region10: #{adjust_layer_forward.1} parent=0 // pred_check
    _
  $region11: #{adjust_layer_forward.1} parent=0 // pred_check_branch
    %13 = sbr.rel (0) target = $region13
  $region12: #{adjust_layer_forward.1} parent=0 // pred_region
    _
  $region13: #{adjust_layer_forward.1} parent=0 // pred_fallthru
    _
  %v15 = vld [vmem:[%s1] sm:$0xf]
  %v16 = vld [vmem:[%s1 + $0x4] sm:$0xf]
  %v17 = vld [vmem:[%s1 + $0x8] sm:$0xf]
  %v18 = vld [vmem:[%s1 + $0xc] sm:$0xf]
  %v19 = vld [vmem:[%s1 + $0x10] sm:$0xf]
  %v20 = vld [vmem:[%s1 + $0x14] sm:$0xf]
  %v21 = vld [vmem:[%s1 + $0x18] sm:$0xf]
  %v22 = vld [vmem:[%s1 + $0x1c] sm:$0xf]
  %v23 = vld [vmem:[%s1 + $0x20] sm:$0xf]
  %v24 = vld [vmem:[%s1 + $0x24] sm:$0xf]
  %v25 = vld [vmem:[%s1 + $0x28] sm:$0xf]
  %v26 = vld [vmem:[%s1 + $0x2c] sm:$0xf]
  %v27 = vld [vmem:[%s1 + $0x30] sm:$0xf]
  %v28 = vld [vmem:[%s1 + $0x34] sm:$0xf]
  %v29 = vld [vmem:[%s1 + $0x38] sm:$0xf]
  %v30 = vld [vmem:[%s1 + $0x3c] sm:$0xf]
  %v31 = vld [vmem:[%s1 + $0x40] sm:$0xf]
  %v32 = vld [vmem:[%s1 + $0x44] sm:$0xf]
  %v33 = vld [vmem:[%s1 + $0x48] sm:$0xf]
  %v34 = vld [vmem:[%s1 + $0x4c] sm:$0xf]
  %v35 = vld [vmem:[%s1 + $0x50] sm:$0xf]
  %v36 = vld [vmem:[%s1 + $0x54] sm:$0xf]
  %v37 = vld [vmem:[%s1 + $0x58] sm:$0xf]
  %v38 = vld [vmem:[%s1 + $0x5c] sm:$0xf]
  %v39 = vld [vmem:[%s1 + $0x60] sm:$0xf]
  %v40 = vld [vmem:[%s1 + $0x64] sm:$0xf]
  %v41 = vld [vmem:[%s1 + $0x68] sm:$0xf]
  %v42 = vld [vmem:[%s1 + $0x6c] sm:$0xf]
  %v43 = vld [vmem:[%s1 + $0x70] sm:$0xf]
  %v44 = vld [vmem:[%s1 + $0x74] sm:$0xf]
  %v45 = vld [vmem:[%s1 + $0x78] sm:$0xf]
  %v46 = vld [vmem:[%s1 + $0x7c] sm:$0xf]
  %v47 = vld [vmem:[%s2] sm:$0xff]
  %v48 = vld [vmem:[%s2 + $0x8] sm:$0xff]
  %v49 = vld [vmem:[%s2 + $0x10] sm:$0xff]
  %v50 = vld [vmem:[%s2 + $0x18] sm:$0xff]
  %v51 = vld [vmem:[%s2 + $0x20] sm:$0xff]
  %v52 = vld [vmem:[%s2 + $0x28] sm:$0xff]
  %v53 = vld [vmem:[%s2 + $0x30] sm:$0xff]
  %v54 = vld [vmem:[%s2 + $0x38] sm:$0xff]
  %v55 = vld [vmem:[%s2 + $0x40] sm:$0xff]
  %v56 = vld [vmem:[%s2 + $0x48] sm:$0xff]
  %v57 = vld [vmem:[%s2 + $0x50] sm:$0xff]
  %v58 = vld [vmem:[%s2 + $0x58] sm:$0xff]
  %v59 = vld [vmem:[%s2 + $0x60] sm:$0xff]
  %v60 = vld [vmem:[%s2 + $0x68] sm:$0xff]
  %v61 = vld [vmem:[%s2 + $0x70] sm:$0xff]
  %v62 = vld [vmem:[%s2 + $0x78] sm:$0xff]
  %v63 = vld [vmem:[%s2 + $0x80] sm:$0xff]
  %v64 = vld [vmem:[%s2 + $0x88] sm:$0xff]
  %v65 = vld [vmem:[%s2 + $0x90] sm:$0xff]
  %v66 = vld [vmem:[%s2 + $0x98] sm:$0xff]
  %v67 = vld [vmem:[%s2 + $0xa0] sm:$0xff]
  %v68 = vld [vmem:[%s2 + $0xa8] sm:$0xff]
  %v69 = vld [vmem:[%s2 + $0xb0] sm:$0xff]
  %v70 = vld [vmem:[%s2 + $0xb8] sm:$0xff]
  %v71 = vld [vmem:[%s2 + $0xc0] sm:$0xff]
  %v72 = vld [vmem:[%s2 + $0xc8] sm:$0xff]
  %v73 = vld [vmem:[%s2 + $0xd0] sm:$0xff]
  %v74 = vld [vmem:[%s2 + $0xd8] sm:$0xff]
  %v75 = vld [vmem:[%s2 + $0xe0] sm:$0xff]
  %v76 = vld [vmem:[%s2 + $0xe8] sm:$0xff]
  %v77 = vld [vmem:[%s2 + $0xf0] sm:$0xff]
  %v78 = vld [vmem:[%s2 + $0xf8] sm:$0xff]
  %v79 = vld [vmem:[%s0] sm:$0xff]
  %v80 = vld [vmem:[%s0 + $0x8] sm:$0xff]
  %v81 = vld [vmem:[%s0 + $0x10] sm:$0xff]
  %v82 = vld [vmem:[%s0 + $0x18] sm:$0xff]
  %v83 = vld [vmem:[%s0 + $0x20] sm:$0xff]
  %v84 = vld [vmem:[%s0 + $0x28] sm:$0xff]
  %v85 = vld [vmem:[%s0 + $0x30] sm:$0xff]
  %v86 = vld [vmem:[%s0 + $0x38] sm:$0xff]
  %v87 = vld [vmem:[%s0 + $0x40] sm:$0xff]
  %v88 = vld [vmem:[%s0 + $0x48] sm:$0xff]
  %v89 = vld [vmem:[%s0 + $0x50] sm:$0xff]
  %v90 = vld [vmem:[%s0 + $0x58] sm:$0xff]
  %v91 = vld [vmem:[%s0 + $0x60] sm:$0xff]
  %v92 = vld [vmem:[%s0 + $0x68] sm:$0xff]
  %v93 = vld [vmem:[%s0 + $0x70] sm:$0xff]
  %v94 = vld [vmem:[%s0 + $0x78] sm:$0xff]
  %v95 = vpack.c.bf16 %v80, %v79
  %v96 = vpack.c.bf16 %v82, %v81
  %v97 = vpack.c.bf16 %v84, %v83
  %v98 = vpack.c.bf16 %v86, %v85
  %v99 = vpack.c.bf16 %v88, %v87
  %v100 = vpack.c.bf16 %v90, %v89
  %v101 = vpack.c.bf16 %v92, %v91
  %v102 = vpack.c.bf16 %v94, %v93
  %104 = vset.pattern.permute.xlu0 0
  %105 = vperm.xlu0 %104, %v47
  %v106 = vpop.permute.xlu0 %105
  %109 = vset.pattern.permute.xlu0 0
  %110 = vperm.xlu0 %109, %v48
  %v111 = vpop.permute.xlu0 %110
  %114 = vset.pattern.permute.xlu0 0
  %115 = vperm.xlu0 %114, %v49
  %v116 = vpop.permute.xlu0 %115
  %119 = vset.pattern.permute.xlu0 0
  %120 = vperm.xlu0 %119, %v50
  %v121 = vpop.permute.xlu0 %120
  %124 = vset.pattern.permute.xlu0 0
  %125 = vperm.xlu0 %124, %v51
  %v126 = vpop.permute.xlu0 %125
  %129 = vset.pattern.permute.xlu0 0
  %130 = vperm.xlu0 %129, %v52
  %v131 = vpop.permute.xlu0 %130
  %134 = vset.pattern.permute.xlu0 0
  %135 = vperm.xlu0 %134, %v53
  %v136 = vpop.permute.xlu0 %135
  %139 = vset.pattern.permute.xlu0 0
  %140 = vperm.xlu0 %139, %v54
  %v141 = vpop.permute.xlu0 %140
  %144 = vset.pattern.permute.xlu0 0
  %145 = vperm.xlu0 %144, %v55
  %v146 = vpop.permute.xlu0 %145
  %149 = vset.pattern.permute.xlu0 0
  %150 = vperm.xlu0 %149, %v56
  %v151 = vpop.permute.xlu0 %150
  %154 = vset.pattern.permute.xlu0 0
  %155 = vperm.xlu0 %154, %v57
  %v156 = vpop.permute.xlu0 %155
  %159 = vset.pattern.permute.xlu0 0
  %160 = vperm.xlu0 %159, %v58
  %v161 = vpop.permute.xlu0 %160
  %164 = vset.pattern.permute.xlu0 0
  %165 = vperm.xlu0 %164, %v59
  %v166 = vpop.permute.xlu0 %165
  %169 = vset.pattern.permute.xlu0 0
  %170 = vperm.xlu0 %169, %v60
  %v171 = vpop.permute.xlu0 %170
  %174 = vset.pattern.permute.xlu0 0
  %175 = vperm.xlu0 %174, %v61
  %v176 = vpop.permute.xlu0 %175
  %179 = vset.pattern.permute.xlu0 0
  %180 = vperm.xlu0 %179, %v62
  %v181 = vpop.permute.xlu0 %180
  %184 = vset.pattern.permute.xlu0 0
  %185 = vperm.xlu0 %184, %v63
  %v186 = vpop.permute.xlu0 %185
  %189 = vset.pattern.permute.xlu0 0
  %190 = vperm.xlu0 %189, %v64
  %v191 = vpop.permute.xlu0 %190
  %194 = vset.pattern.permute.xlu0 0
  %195 = vperm.xlu0 %194, %v65
  %v196 = vpop.permute.xlu0 %195
  %199 = vset.pattern.permute.xlu0 0
  %200 = vperm.xlu0 %199, %v66
  %v201 = vpop.permute.xlu0 %200
  %204 = vset.pattern.permute.xlu0 0
  %205 = vperm.xlu0 %204, %v67
  %v206 = vpop.permute.xlu0 %205
  %209 = vset.pattern.permute.xlu0 0
  %210 = vperm.xlu0 %209, %v68
  %v211 = vpop.permute.xlu0 %210
  %214 = vset.pattern.permute.xlu0 0
  %215 = vperm.xlu0 %214, %v69
  %v216 = vpop.permute.xlu0 %215
  %219 = vset.pattern.permute.xlu0 0
  %220 = vperm.xlu0 %219, %v70
  %v221 = vpop.permute.xlu0 %220
  %224 = vset.pattern.permute.xlu0 0
  %225 = vperm.xlu0 %224, %v71
  %v226 = vpop.permute.xlu0 %225
  %229 = vset.pattern.permute.xlu0 0
  %230 = vperm.xlu0 %229, %v72
  %v231 = vpop.permute.xlu0 %230
  %234 = vset.pattern.permute.xlu0 0
  %235 = vperm.xlu0 %234, %v73
  %v236 = vpop.permute.xlu0 %235
  %239 = vset.pattern.permute.xlu0 0
  %240 = vperm.xlu0 %239, %v74
  %v241 = vpop.permute.xlu0 %240
  %244 = vset.pattern.permute.xlu0 0
  %245 = vperm.xlu0 %244, %v75
  %v246 = vpop.permute.xlu0 %245
  %249 = vset.pattern.permute.xlu0 0
  %250 = vperm.xlu0 %249, %v76
  %v251 = vpop.permute.xlu0 %250
  %254 = vset.pattern.permute.xlu0 0
  %255 = vperm.xlu0 %254, %v77
  %v256 = vpop.permute.xlu0 %255
  %259 = vset.pattern.permute.xlu0 0
  %260 = vperm.xlu0 %259, %v78
  %v261 = vpop.permute.xlu0 %260
  %v295 = vunpack.c.l.b16 %v15
  %v296 = vunpack.c.l.b16 %v16
  %v297 = vunpack.c.l.b16 %v17
  %v298 = vunpack.c.l.b16 %v18
  %v299 = vunpack.c.l.b16 %v19
  %v300 = vunpack.c.l.b16 %v20
  %v301 = vunpack.c.l.b16 %v21
  %v302 = vunpack.c.l.b16 %v22
  %v303 = vunpack.c.l.b16 %v23
  %v304 = vunpack.c.l.b16 %v24
  %v305 = vunpack.c.l.b16 %v25
  %v306 = vunpack.c.l.b16 %v26
  %v307 = vunpack.c.l.b16 %v27
  %v308 = vunpack.c.l.b16 %v28
  %v309 = vunpack.c.l.b16 %v29
  %v310 = vunpack.c.l.b16 %v30
  %v311 = vunpack.c.l.b16 %v31
  %v312 = vunpack.c.l.b16 %v32
  %v313 = vunpack.c.l.b16 %v33
  %v314 = vunpack.c.l.b16 %v34
  %v315 = vunpack.c.l.b16 %v35
  %v316 = vunpack.c.l.b16 %v36
  %v317 = vunpack.c.l.b16 %v37
  %v318 = vunpack.c.l.b16 %v38
  %v319 = vunpack.c.l.b16 %v39
  %v320 = vunpack.c.l.b16 %v40
  %v321 = vunpack.c.l.b16 %v41
  %v322 = vunpack.c.l.b16 %v42
  %v323 = vunpack.c.l.b16 %v43
  %v324 = vunpack.c.l.b16 %v44
  %v325 = vunpack.c.l.b16 %v45
  %v326 = vunpack.c.l.b16 %v46
  %v327 = vpack.c.b16 %v296, %v295
  %v328 = vpack.c.b16 %v298, %v297
  %v329 = vpack.c.b16 %v300, %v299
  %v330 = vpack.c.b16 %v302, %v301
  %v331 = vpack.c.b16 %v304, %v303
  %v332 = vpack.c.b16 %v306, %v305
  %v333 = vpack.c.b16 %v308, %v307
  %v334 = vpack.c.b16 %v310, %v309
  %v335 = vpack.c.b16 %v312, %v311
  %v336 = vpack.c.b16 %v314, %v313
  %v337 = vpack.c.b16 %v316, %v315
  %v338 = vpack.c.b16 %v318, %v317
  %v339 = vpack.c.b16 %v320, %v319
  %v340 = vpack.c.b16 %v322, %v321
  %v341 = vpack.c.b16 %v324, %v323
  %v342 = vpack.c.b16 %v326, %v325
  %359 = vmatprep.subr.bf16.mxu0 0
  %360 = vmatpush1.bf16.msra.mxu0 %v102
  %361 = vmatprep.subr.bf16.mxu0 0
  %362 = vmatpush1.bf16.msra.mxu0 %v101
  %363 = vmatprep.subr.bf16.mxu0 0
  %364 = vmatpush1.bf16.msra.mxu0 %v100
  %365 = vmatprep.subr.bf16.mxu0 0
  %366 = vmatpush1.bf16.msra.mxu0 %v99
  %367 = vmatprep.subr.bf16.mxu0 0
  %368 = vmatpush1.bf16.msra.mxu0 %v98
  %369 = vmatprep.subr.bf16.mxu0 0
  %370 = vmatpush1.bf16.msra.mxu0 %v97
  %371 = vmatprep.subr.bf16.mxu0 0
  %372 = vmatpush1.bf16.msra.mxu0 %v96
  %373 = vmatprep.subr.bf16.mxu0 0
  %374 = vmatpush1.bf16.msra.mxu0 %v95
  %375 = vmatprep.subr.bf16.mxu0 0
  %376 = vmatpush2.bf16.msra.mxu0 0
  %377 = vmatprep.subr.bf16.mxu0 0
  %378 = vmatpush2.bf16.msra.mxu0 0
  %379 = vmatprep.subr.bf16.mxu0 0
  %380 = vmatpush2.bf16.msra.mxu0 0
  %381 = vmatprep.subr.bf16.mxu0 0
  %382 = vmatpush2.bf16.msra.mxu0 0
  %383 = vmatprep.subr.bf16.mxu0 0
  %384 = vmatpush2.bf16.msra.mxu0 0
  %385 = vmatprep.subr.bf16.mxu0 0
  %386 = vmatpush2.bf16.msra.mxu0 0
  %387 = vmatprep.subr.bf16.mxu0 0
  %388 = vmatpush2.bf16.msra.mxu0 0
  %389 = vmatprep.subr.bf16.mxu0 0
  %390 = vmatpush2.bf16.msra.mxu0 0
  %391 = vmatprep.mubr.bf16.mxu0 0
  %392 = vmatmul.mubr.bf16.gmra.mxu0 %v327
  %v393 = vpop.f32.mrf.mxu0
  %v394 = vadd.f32 %v106, %v393
  %v395 = vpop.f32.mrf.mxu0
  %v396 = vpop.f32.mrf.mxu0
  %v397 = vadd.f32 %v111, %v396
  %v398 = vpop.f32.mrf.mxu0
  %399 = vmatprep.mubr.bf16.mxu0 0
  %400 = vmatmul.mubr.bf16.gmra.mxu0 %v328
  %v401 = vpop.f32.mrf.mxu0
  %v402 = vadd.f32 %v116, %v401
  %v403 = vpop.f32.mrf.mxu0
  %v404 = vpop.f32.mrf.mxu0
  %v405 = vadd.f32 %v121, %v404
  %v406 = vpop.f32.mrf.mxu0
  %407 = vmatprep.mubr.bf16.mxu0 0
  %408 = vmatmul.mubr.bf16.gmra.mxu0 %v329
  %v409 = vpop.f32.mrf.mxu0
  %v410 = vadd.f32 %v126, %v409
  %v411 = vpop.f32.mrf.mxu0
  %v412 = vpop.f32.mrf.mxu0
  %v413 = vadd.f32 %v131, %v412
  %v414 = vpop.f32.mrf.mxu0
  %415 = vmatprep.mubr.bf16.mxu0 0
  %416 = vmatmul.mubr.bf16.gmra.mxu0 %v330
  %v417 = vpop.f32.mrf.mxu0
  %v418 = vadd.f32 %v136, %v417
  %v419 = vpop.f32.mrf.mxu0
  %v420 = vpop.f32.mrf.mxu0
  %v421 = vadd.f32 %v141, %v420
  %v422 = vpop.f32.mrf.mxu0
  %423 = vmatprep.mubr.bf16.mxu0 0
  %424 = vmatmul.mubr.bf16.gmra.mxu0 %v331
  %v425 = vpop.f32.mrf.mxu0
  %v426 = vadd.f32 %v146, %v425
  %v427 = vpop.f32.mrf.mxu0
  %v428 = vpop.f32.mrf.mxu0
  %v429 = vadd.f32 %v151, %v428
  %v430 = vpop.f32.mrf.mxu0
  %431 = vmatprep.mubr.bf16.mxu0 0
  %432 = vmatmul.mubr.bf16.gmra.mxu0 %v332
  %v433 = vpop.f32.mrf.mxu0
  %v434 = vadd.f32 %v156, %v433
  %v435 = vpop.f32.mrf.mxu0
  %v436 = vpop.f32.mrf.mxu0
  %v437 = vadd.f32 %v161, %v436
  %v438 = vpop.f32.mrf.mxu0
  %439 = vmatprep.mubr.bf16.mxu0 0
  %440 = vmatmul.mubr.bf16.gmra.mxu0 %v333
  %v441 = vpop.f32.mrf.mxu0
  %v442 = vadd.f32 %v166, %v441
  %v443 = vpop.f32.mrf.mxu0
  %v444 = vpop.f32.mrf.mxu0
  %v445 = vadd.f32 %v171, %v444
  %v446 = vpop.f32.mrf.mxu0
  %447 = vmatprep.mubr.bf16.mxu0 0
  %448 = vmatmul.mubr.bf16.gmra.mxu0 %v334
  %v449 = vpop.f32.mrf.mxu0
  %v450 = vadd.f32 %v176, %v449
  %v451 = vpop.f32.mrf.mxu0
  %v452 = vpop.f32.mrf.mxu0
  %v453 = vadd.f32 %v181, %v452
  %v454 = vpop.f32.mrf.mxu0
  %455 = vmatprep.mubr.bf16.mxu0 0
  %456 = vmatmul.mubr.bf16.gmra.mxu0 %v335
  %v457 = vpop.f32.mrf.mxu0
  %v458 = vadd.f32 %v186, %v457
  %v459 = vpop.f32.mrf.mxu0
  %v460 = vpop.f32.mrf.mxu0
  %v461 = vadd.f32 %v191, %v460
  %v462 = vpop.f32.mrf.mxu0
  %463 = vmatprep.mubr.bf16.mxu0 0
  %464 = vmatmul.mubr.bf16.gmra.mxu0 %v336
  %v465 = vpop.f32.mrf.mxu0
  %v466 = vadd.f32 %v196, %v465
  %v467 = vpop.f32.mrf.mxu0
  %v468 = vpop.f32.mrf.mxu0
  %v469 = vadd.f32 %v201, %v468
  %v470 = vpop.f32.mrf.mxu0
  %471 = vmatprep.mubr.bf16.mxu0 0
  %472 = vmatmul.mubr.bf16.gmra.mxu0 %v337
  %v473 = vpop.f32.mrf.mxu0
  %v474 = vadd.f32 %v206, %v473
  %v475 = vpop.f32.mrf.mxu0
  %v476 = vpop.f32.mrf.mxu0
  %v477 = vadd.f32 %v211, %v476
  %v478 = vpop.f32.mrf.mxu0
  %479 = vmatprep.mubr.bf16.mxu0 0
  %480 = vmatmul.mubr.bf16.gmra.mxu0 %v338
  %v481 = vpop.f32.mrf.mxu0
  %v482 = vadd.f32 %v216, %v481
  %v483 = vpop.f32.mrf.mxu0
  %v484 = vpop.f32.mrf.mxu0
  %v485 = vadd.f32 %v221, %v484
  %v486 = vpop.f32.mrf.mxu0
  %487 = vmatprep.mubr.bf16.mxu0 0
  %488 = vmatmul.mubr.bf16.gmra.mxu0 %v339
  %v489 = vpop.f32.mrf.mxu0
  %v490 = vadd.f32 %v226, %v489
  %v491 = vpop.f32.mrf.mxu0
  %v492 = vpop.f32.mrf.mxu0
  %v493 = vadd.f32 %v231, %v492
  %v494 = vpop.f32.mrf.mxu0
  %495 = vmatprep.mubr.bf16.mxu0 0
  %496 = vmatmul.mubr.bf16.gmra.mxu0 %v340
  %v497 = vpop.f32.mrf.mxu0
  %v498 = vadd.f32 %v236, %v497
  %v499 = vpop.f32.mrf.mxu0
  %v500 = vpop.f32.mrf.mxu0
  %v501 = vadd.f32 %v241, %v500
  %v502 = vpop.f32.mrf.mxu0
  %503 = vmatprep.mubr.bf16.mxu0 0
  %504 = vmatmul.mubr.bf16.gmra.mxu0 %v341
  %v505 = vpop.f32.mrf.mxu0
  %v506 = vadd.f32 %v246, %v505
  %v507 = vpop.f32.mrf.mxu0
  %v508 = vpop.f32.mrf.mxu0
  %v509 = vadd.f32 %v251, %v508
  %v510 = vpop.f32.mrf.mxu0
  %511 = vmatprep.mubr.bf16.mxu0 0
  %512 = vmatmul.mubr.bf16.gmra.mxu0 %v342
  %v513 = vpop.f32.mrf.mxu0
  %v514 = vadd.f32 %v256, %v513
  %v515 = vpop.f32.mrf.mxu0
  %v516 = vpop.f32.mrf.mxu0
  %v517 = vadd.f32 %v261, %v516
  %v518 = vpop.f32.mrf.mxu0
  %519 = vdwg.mxu0
  %vm520 = vcmask 400384
  %521 = vst.msk [vmem:[%s3] sm:$0xff] %vm520, %v394
  %522 = vst.msk [vmem:[%s3 + $0x8] sm:$0xff] %vm520, %v397
  %523 = vst.msk [vmem:[%s3 + $0x10] sm:$0xff] %vm520, %v402
  %524 = vst.msk [vmem:[%s3 + $0x18] sm:$0xff] %vm520, %v405
  %525 = vst.msk [vmem:[%s3 + $0x20] sm:$0xff] %vm520, %v410
  %526 = vst.msk [vmem:[%s3 + $0x28] sm:$0xff] %vm520, %v413
  %527 = vst.msk [vmem:[%s3 + $0x30] sm:$0xff] %vm520, %v418
  %528 = vst.msk [vmem:[%s3 + $0x38] sm:$0xff] %vm520, %v421
  %529 = vst.msk [vmem:[%s3 + $0x40] sm:$0xff] %vm520, %v426
  %530 = vst.msk [vmem:[%s3 + $0x48] sm:$0xff] %vm520, %v429
  %531 = vst.msk [vmem:[%s3 + $0x50] sm:$0xff] %vm520, %v434
  %532 = vst.msk [vmem:[%s3 + $0x58] sm:$0xff] %vm520, %v437
  %533 = vst.msk [vmem:[%s3 + $0x60] sm:$0xff] %vm520, %v442
  %534 = vst.msk [vmem:[%s3 + $0x68] sm:$0xff] %vm520, %v445
  %535 = vst.msk [vmem:[%s3 + $0x70] sm:$0xff] %vm520, %v450
  %536 = vst.msk [vmem:[%s3 + $0x78] sm:$0xff] %vm520, %v453
  %537 = vst.msk [vmem:[%s3 + $0x80] sm:$0xff] %vm520, %v458
  %538 = vst.msk [vmem:[%s3 + $0x88] sm:$0xff] %vm520, %v461
  %539 = vst.msk [vmem:[%s3 + $0x90] sm:$0xff] %vm520, %v466
  %540 = vst.msk [vmem:[%s3 + $0x98] sm:$0xff] %vm520, %v469
  %541 = vst.msk [vmem:[%s3 + $0xa0] sm:$0xff] %vm520, %v474
  %542 = vst.msk [vmem:[%s3 + $0xa8] sm:$0xff] %vm520, %v477
  %543 = vst.msk [vmem:[%s3 + $0xb0] sm:$0xff] %vm520, %v482
  %544 = vst.msk [vmem:[%s3 + $0xb8] sm:$0xff] %vm520, %v485
  %545 = vst.msk [vmem:[%s3 + $0xc0] sm:$0xff] %vm520, %v490
  %546 = vst.msk [vmem:[%s3 + $0xc8] sm:$0xff] %vm520, %v493
  %547 = vst.msk [vmem:[%s3 + $0xd0] sm:$0xff] %vm520, %v498
  %548 = vst.msk [vmem:[%s3 + $0xd8] sm:$0xff] %vm520, %v501
  %549 = vst.msk [vmem:[%s3 + $0xe0] sm:$0xff] %vm520, %v506
  %550 = vst.msk [vmem:[%s3 + $0xe8] sm:$0xff] %vm520, %v509
  %551 = vst.msk [vmem:[%s3 + $0xf0] sm:$0xff] %vm520, %v514
  %552 = vst.msk [vmem:[%s3 + $0xf8] sm:$0xff] %vm520, %v517
  %s553 = scalar_lea.vmem %s0, 128
  %v554 = vld [vmem:[%s553] sm:$0xff]
  %v555 = vld [vmem:[%s553 + $0x8] sm:$0xff]
  %v556 = vld [vmem:[%s553 + $0x10] sm:$0xff]
  %v557 = vld [vmem:[%s553 + $0x18] sm:$0xff]
  %v558 = vld [vmem:[%s553 + $0x20] sm:$0xff]
  %v559 = vld [vmem:[%s553 + $0x28] sm:$0xff]
  %v560 = vld [vmem:[%s553 + $0x30] sm:$0xff]
  %v561 = vld [vmem:[%s553 + $0x38] sm:$0xff]
  %v562 = vld [vmem:[%s553 + $0x40] sm:$0xff]
  %v563 = vld [vmem:[%s553 + $0x48] sm:$0xff]
  %v564 = vld [vmem:[%s553 + $0x50] sm:$0xff]
  %v565 = vld [vmem:[%s553 + $0x58] sm:$0xff]
  %v566 = vld [vmem:[%s553 + $0x60] sm:$0xff]
  %v567 = vld [vmem:[%s553 + $0x68] sm:$0xff]
  %v568 = vld [vmem:[%s553 + $0x70] sm:$0xff]
  %v569 = vld [vmem:[%s553 + $0x78] sm:$0xff]
  %v570 = vpack.c.bf16 %v555, %v554
  %v571 = vpack.c.bf16 %v557, %v556
  %v572 = vpack.c.bf16 %v559, %v558
  %v573 = vpack.c.bf16 %v561, %v560
  %v574 = vpack.c.bf16 %v563, %v562
  %v575 = vpack.c.bf16 %v565, %v564
  %v576 = vpack.c.bf16 %v567, %v566
  %v577 = vpack.c.bf16 %v569, %v568
  %578 = vmatprep.subr.bf16.mxu0 0
  %579 = vmatpush1.bf16.msra.mxu0 %v577
  %580 = vmatprep.subr.bf16.mxu0 0
  %581 = vmatpush1.bf16.msra.mxu0 %v576
  %582 = vmatprep.subr.bf16.mxu0 0
  %583 = vmatpush1.bf16.msra.mxu0 %v575
  %584 = vmatprep.subr.bf16.mxu0 0
  %585 = vmatpush1.bf16.msra.mxu0 %v574
  %586 = vmatprep.subr.bf16.mxu0 0
  %587 = vmatpush1.bf16.msra.mxu0 %v573
  %588 = vmatprep.subr.bf16.mxu0 0
  %589 = vmatpush1.bf16.msra.mxu0 %v572
  %590 = vmatprep.subr.bf16.mxu0 0
  %591 = vmatpush1.bf16.msra.mxu0 %v571
  %592 = vmatprep.subr.bf16.mxu0 0
  %593 = vmatpush1.bf16.msra.mxu0 %v570
  %594 = vmatprep.subr.bf16.mxu0 0
  %595 = vmatpush2.bf16.msra.mxu0 0
  %596 = vmatprep.subr.bf16.mxu0 0
  %597 = vmatpush2.bf16.msra.mxu0 0
  %598 = vmatprep.subr.bf16.mxu0 0
  %599 = vmatpush2.bf16.msra.mxu0 0
  %600 = vmatprep.subr.bf16.mxu0 0
  %601 = vmatpush2.bf16.msra.mxu0 0
  %602 = vmatprep.subr.bf16.mxu0 0
  %603 = vmatpush2.bf16.msra.mxu0 0
  %604 = vmatprep.subr.bf16.mxu0 0
  %605 = vmatpush2.bf16.msra.mxu0 0
  %606 = vmatprep.subr.bf16.mxu0 0
  %607 = vmatpush2.bf16.msra.mxu0 0
  %608 = vmatprep.subr.bf16.mxu0 0
  %609 = vmatpush2.bf16.msra.mxu0 0
  %610 = vmatprep.mubr.bf16.mxu0 0
  %611 = vmatmul.mubr.bf16.gmra.mxu0 %v327
  %v612 = vpop.f32.mrf.mxu0
  %v613 = vadd.f32 %v106, %v612
  %v614 = vpop.f32.mrf.mxu0
  %v615 = vpop.f32.mrf.mxu0
  %v616 = vadd.f32 %v111, %v615
  %v617 = vpop.f32.mrf.mxu0
  %618 = vmatprep.mubr.bf16.mxu0 0
  %619 = vmatmul.mubr.bf16.gmra.mxu0 %v328
  %v620 = vpop.f32.mrf.mxu0
  %v621 = vadd.f32 %v116, %v620
  %v622 = vpop.f32.mrf.mxu0
  %v623 = vpop.f32.mrf.mxu0
  %v624 = vadd.f32 %v121, %v623
  %v625 = vpop.f32.mrf.mxu0
  %626 = vmatprep.mubr.bf16.mxu0 0
  %627 = vmatmul.mubr.bf16.gmra.mxu0 %v329
  %v628 = vpop.f32.mrf.mxu0
  %v629 = vadd.f32 %v126, %v628
  %v630 = vpop.f32.mrf.mxu0
  %v631 = vpop.f32.mrf.mxu0
  %v632 = vadd.f32 %v131, %v631
  %v633 = vpop.f32.mrf.mxu0
  %634 = vmatprep.mubr.bf16.mxu0 0
  %635 = vmatmul.mubr.bf16.gmra.mxu0 %v330
  %v636 = vpop.f32.mrf.mxu0
  %v637 = vadd.f32 %v136, %v636
  %v638 = vpop.f32.mrf.mxu0
  %v639 = vpop.f32.mrf.mxu0
  %v640 = vadd.f32 %v141, %v639
  %v641 = vpop.f32.mrf.mxu0
  %642 = vmatprep.mubr.bf16.mxu0 0
  %643 = vmatmul.mubr.bf16.gmra.mxu0 %v331
  %v644 = vpop.f32.mrf.mxu0
  %v645 = vadd.f32 %v146, %v644
  %v646 = vpop.f32.mrf.mxu0
  %v647 = vpop.f32.mrf.mxu0
  %v648 = vadd.f32 %v151, %v647
  %v649 = vpop.f32.mrf.mxu0
  %650 = vmatprep.mubr.bf16.mxu0 0
  %651 = vmatmul.mubr.bf16.gmra.mxu0 %v332
  %v652 = vpop.f32.mrf.mxu0
  %v653 = vadd.f32 %v156, %v652
  %v654 = vpop.f32.mrf.mxu0
  %v655 = vpop.f32.mrf.mxu0
  %v656 = vadd.f32 %v161, %v655
  %v657 = vpop.f32.mrf.mxu0
  %658 = vmatprep.mubr.bf16.mxu0 0
  %659 = vmatmul.mubr.bf16.gmra.mxu0 %v333
  %v660 = vpop.f32.mrf.mxu0
  %v661 = vadd.f32 %v166, %v660
  %v662 = vpop.f32.mrf.mxu0
  %v663 = vpop.f32.mrf.mxu0
  %v664 = vadd.f32 %v171, %v663
  %v665 = vpop.f32.mrf.mxu0
  %666 = vmatprep.mubr.bf16.mxu0 0
  %667 = vmatmul.mubr.bf16.gmra.mxu0 %v334
  %v668 = vpop.f32.mrf.mxu0
  %v669 = vadd.f32 %v176, %v668
  %v670 = vpop.f32.mrf.mxu0
  %v671 = vpop.f32.mrf.mxu0
  %v672 = vadd.f32 %v181, %v671
  %v673 = vpop.f32.mrf.mxu0
  %674 = vmatprep.mubr.bf16.mxu0 0
  %675 = vmatmul.mubr.bf16.gmra.mxu0 %v335
  %v676 = vpop.f32.mrf.mxu0
  %v677 = vadd.f32 %v186, %v676
  %v678 = vpop.f32.mrf.mxu0
  %v679 = vpop.f32.mrf.mxu0
  %v680 = vadd.f32 %v191, %v679
  %v681 = vpop.f32.mrf.mxu0
  %682 = vmatprep.mubr.bf16.mxu0 0
  %683 = vmatmul.mubr.bf16.gmra.mxu0 %v336
  %v684 = vpop.f32.mrf.mxu0
  %v685 = vadd.f32 %v196, %v684
  %v686 = vpop.f32.mrf.mxu0
  %v687 = vpop.f32.mrf.mxu0
  %v688 = vadd.f32 %v201, %v687
  %v689 = vpop.f32.mrf.mxu0
  %690 = vmatprep.mubr.bf16.mxu0 0
  %691 = vmatmul.mubr.bf16.gmra.mxu0 %v337
  %v692 = vpop.f32.mrf.mxu0
  %v693 = vadd.f32 %v206, %v692
  %v694 = vpop.f32.mrf.mxu0
  %v695 = vpop.f32.mrf.mxu0
  %v696 = vadd.f32 %v211, %v695
  %v697 = vpop.f32.mrf.mxu0
  %698 = vmatprep.mubr.bf16.mxu0 0
  %699 = vmatmul.mubr.bf16.gmra.mxu0 %v338
  %v700 = vpop.f32.mrf.mxu0
  %v701 = vadd.f32 %v216, %v700
  %v702 = vpop.f32.mrf.mxu0
  %v703 = vpop.f32.mrf.mxu0
  %v704 = vadd.f32 %v221, %v703
  %v705 = vpop.f32.mrf.mxu0
  %706 = vmatprep.mubr.bf16.mxu0 0
  %707 = vmatmul.mubr.bf16.gmra.mxu0 %v339
  %v708 = vpop.f32.mrf.mxu0
  %v709 = vadd.f32 %v226, %v708
  %v710 = vpop.f32.mrf.mxu0
  %v711 = vpop.f32.mrf.mxu0
  %v712 = vadd.f32 %v231, %v711
  %v713 = vpop.f32.mrf.mxu0
  %714 = vmatprep.mubr.bf16.mxu0 0
  %715 = vmatmul.mubr.bf16.gmra.mxu0 %v340
  %v716 = vpop.f32.mrf.mxu0
  %v717 = vadd.f32 %v236, %v716
  %v718 = vpop.f32.mrf.mxu0
  %v719 = vpop.f32.mrf.mxu0
  %v720 = vadd.f32 %v241, %v719
  %v721 = vpop.f32.mrf.mxu0
  %722 = vmatprep.mubr.bf16.mxu0 0
  %723 = vmatmul.mubr.bf16.gmra.mxu0 %v341
  %v724 = vpop.f32.mrf.mxu0
  %v725 = vadd.f32 %v246, %v724
  %v726 = vpop.f32.mrf.mxu0
  %v727 = vpop.f32.mrf.mxu0
  %v728 = vadd.f32 %v251, %v727
  %v729 = vpop.f32.mrf.mxu0
  %730 = vmatprep.mubr.bf16.mxu0 0
  %731 = vmatmul.mubr.bf16.gmra.mxu0 %v342
  %v732 = vpop.f32.mrf.mxu0
  %v733 = vadd.f32 %v256, %v732
  %v734 = vpop.f32.mrf.mxu0
  %v735 = vpop.f32.mrf.mxu0
  %v736 = vadd.f32 %v261, %v735
  %v737 = vpop.f32.mrf.mxu0
  %738 = vdwg.mxu0
  %s739 = scalar_lea.vmem %s3, 256
  %740 = vst.msk [vmem:[%s739] sm:$0xff] %vm520, %v613
  %741 = vst.msk [vmem:[%s739 + $0x8] sm:$0xff] %vm520, %v616
  %742 = vst.msk [vmem:[%s739 + $0x10] sm:$0xff] %vm520, %v621
  %743 = vst.msk [vmem:[%s739 + $0x18] sm:$0xff] %vm520, %v624
  %744 = vst.msk [vmem:[%s739 + $0x20] sm:$0xff] %vm520, %v629
  %745 = vst.msk [vmem:[%s739 + $0x28] sm:$0xff] %vm520, %v632
  %746 = vst.msk [vmem:[%s739 + $0x30] sm:$0xff] %vm520, %v637
  %747 = vst.msk [vmem:[%s739 + $0x38] sm:$0xff] %vm520, %v640
  %748 = vst.msk [vmem:[%s739 + $0x40] sm:$0xff] %vm520, %v645
  %749 = vst.msk [vmem:[%s739 + $0x48] sm:$0xff] %vm520, %v648
  %750 = vst.msk [vmem:[%s739 + $0x50] sm:$0xff] %vm520, %v653
  %751 = vst.msk [vmem:[%s739 + $0x58] sm:$0xff] %vm520, %v656
  %752 = vst.msk [vmem:[%s739 + $0x60] sm:$0xff] %vm520, %v661
  %753 = vst.msk [vmem:[%s739 + $0x68] sm:$0xff] %vm520, %v664
  %754 = vst.msk [vmem:[%s739 + $0x70] sm:$0xff] %vm520, %v669
  %755 = vst.msk [vmem:[%s739 + $0x78] sm:$0xff] %vm520, %v672
  %756 = vst.msk [vmem:[%s739 + $0x80] sm:$0xff] %vm520, %v677
  %757 = vst.msk [vmem:[%s739 + $0x88] sm:$0xff] %vm520, %v680
  %758 = vst.msk [vmem:[%s739 + $0x90] sm:$0xff] %vm520, %v685
  %759 = vst.msk [vmem:[%s739 + $0x98] sm:$0xff] %vm520, %v688
  %760 = vst.msk [vmem:[%s739 + $0xa0] sm:$0xff] %vm520, %v693
  %761 = vst.msk [vmem:[%s739 + $0xa8] sm:$0xff] %vm520, %v696
  %762 = vst.msk [vmem:[%s739 + $0xb0] sm:$0xff] %vm520, %v701
  %763 = vst.msk [vmem:[%s739 + $0xb8] sm:$0xff] %vm520, %v704
  %764 = vst.msk [vmem:[%s739 + $0xc0] sm:$0xff] %vm520, %v709
  %765 = vst.msk [vmem:[%s739 + $0xc8] sm:$0xff] %vm520, %v712
  %766 = vst.msk [vmem:[%s739 + $0xd0] sm:$0xff] %vm520, %v717
  %767 = vst.msk [vmem:[%s739 + $0xd8] sm:$0xff] %vm520, %v720
  %768 = vst.msk [vmem:[%s739 + $0xe0] sm:$0xff] %vm520, %v725
  %769 = vst.msk [vmem:[%s739 + $0xe8] sm:$0xff] %vm520, %v728
  %770 = vst.msk [vmem:[%s739 + $0xf0] sm:$0xff] %vm520, %v733
  %771 = vst.msk [vmem:[%s739 + $0xf8] sm:$0xff] %vm520, %v736
  // Predicated region
  $region14: #{adjust_layer_forward.1} parent=0 // pred_check
    _
  $region15: #{adjust_layer_forward.1} parent=0 // pred_check_branch
    %773 = sbr.rel (0) target = $region17
  $region16: #{adjust_layer_forward.1} parent=0 // pred_region
    _
  $region17: #{adjust_layer_forward.1} parent=0 // pred_fallthru
    _
  // Predicated region
  $region18: #{adjust_layer_forward.1} parent=0 // pred_check
    _
  $region19: #{adjust_layer_forward.1} parent=0 // pred_check_branch
    %775 = sbr.rel (0) target = $region21
  $region20: #{adjust_layer_forward.1} parent=0 // pred_region
    _
  $region21: #{adjust_layer_forward.1} parent=0 // pred_fallthru
    _

</llo_original>
